<compile_context>
chip_gen: v6e
topology: v6e:2x2x1
jax: 0.10.0
libtpu: 0.0.40
codegen_flags: <defaults>
</compile_context>

<pallas_src>
import functools

import jax
import jax.numpy as jnp
from jax.experimental import pallas as pl
from jax.experimental.pallas import tpu as pltpu


def timeconv_kernel(x_ref, w_ref, b_ref, o_ref, *, c_out):
    """x_ref: (tile_m, K*C_in); w_ref: (K*C_in, 3*C_out); b_ref: (1, 3*C_out);
    o_ref: (tile_m, C_out)."""
    # Single fused MXU matmul covering conv1 / conv2 / conv3.
    acc = jnp.dot(x_ref[...], w_ref[...], preferred_element_type=jnp.float32)
    acc = acc + b_ref[...]                       # (1, 3*C_out) broadcasts

    y = (acc[:, :c_out]
         + jax.nn.sigmoid(acc[:, c_out:2 * c_out])   # EUP, overlaps other slots
         + acc[:, 2 * c_out:])
    o_ref[...] = jnp.maximum(y, 0.0).astype(o_ref.dtype)


def time_conv_pallas(x, params, *, kernel_size, tile_m=None):
    """x: (B, H, W, C_in)  ->  (B, H, W_out, C_out)."""
    B, H, W, C_in = x.shape
    w1, b1, w2, b2, w3, b3 = params
    K, _, C_out = w1.shape
    assert K == kernel_size
    W_out = W - K + 1
    Kc = K * C_in
    M = B * H * W_out

    # --- Layout plumbing (wrapper-side, pure data movement) ----------------
    # im2col over the K taps: each output position's receptive field becomes a
    # contiguous row of length K*C_in (t-major, then c).
    x_rows = x.reshape(B * H, W, C_in)
    xt = jnp.concatenate([x_rows[:, t:t + W_out, :] for t in range(K)], axis=-1)
    xt = xt.reshape(M, Kc)

    # Fuse parameters once, outside the kernel.  (K, C_in, 3*C_out) ->
    # (K*C_in, 3*C_out); row order matches the im2col lane order above.
    w_fused = jnp.concatenate([w1, w2, w3], axis=-1).reshape(Kc, 3 * C_out)
    b_fused = jnp.concatenate([b1, b2, b3]).reshape(1, 3 * C_out)

    # --- Tile sizing --------------------------------------------------------
    if tile_m is None:
        if M >= 16:
            # Keep >=2 grid blocks (v7x megacore) but make each block as fat as
            # possible.
            tile_m = min(2048, pl.cdiv(M, 2))
        else:
            tile_m = M
    if tile_m >= 8:
        tile_m = ((tile_m + 7) // 8) * 8          # sublane-aligned
    tile_m = max(tile_m, 1)

    # Rough per-row f32 VMEM cost: double-buffered input + output plus the fused
    # 3*C_out accumulator.  Budget well under the scoped limit so the same tile
    # also works on v7x (64 MiB physical VMEM).
    bytes_per_row = 4 * (2 * Kc + 2 * C_out + 3 * C_out)
    vmem_budget = 24 << 20
    max_rows = max(8, (vmem_budget // max(bytes_per_row, 1)) // 8 * 8)
    tile_m = min(tile_m, max_rows)

    # Pad the row axis so it divides evenly into tiles.
    M_pad = pl.cdiv(M, tile_m) * tile_m
    if M_pad != M:
        xt = jnp.pad(xt, ((0, M_pad - M), (0, 0)))

    kern = functools.partial(timeconv_kernel, c_out=C_out)

    out = pl.pallas_call(
        kern,
        out_shape=jax.ShapeDtypeStruct((M_pad, C_out), x.dtype),
        grid_spec=pltpu.PrefetchScalarGridSpec(
            num_scalar_prefetch=0,
            grid=(M_pad // tile_m,),
            in_specs=[
                pl.BlockSpec((tile_m, Kc), lambda i: (i, 0)),
                pl.BlockSpec((Kc, 3 * C_out), lambda i: (0, 0)),
                pl.BlockSpec((1, 3 * C_out), lambda i: (0, 0)),
            ],
            out_specs=pl.BlockSpec((tile_m, C_out), lambda i: (i, 0)),
        ),
        compiler_params=pltpu.CompilerParams(
            dimension_semantics=("parallel",)),
    )(xt, w_fused, b_fused)

    if M_pad != M:
        out = out[:M]
    return out.reshape(B, H, W_out, C_out)


def time_conv_reference(x, params, *, kernel_size):
    """Plain-JAX reference mirroring the PyTorch forward."""
    w1, b1, w2, b2, w3, b3 = params
    K = kernel_size
    W = x.shape[2]
    W_out = W - K + 1

    def conv(w, b):
        acc = jnp.zeros(x.shape[:2] + (W_out, w.shape[-1]), jnp.float32)
        for t in range(K):
            acc = acc + jnp.einsum('bhwc,cd->bhwd',
                                   x[:, :, t:t + W_out, :], w[t])
        return acc + b

    y = conv(w1, b1) + jax.nn.sigmoid(conv(w2, b2)) + conv(w3, b3)
    return jnp.maximum(y, 0.0)


if __name__ == "__main__":
    # Small shapes consistent with the module's forward:
    #   input X: (B, H, W, C_in) = (2, 16, 8, 4),  C_out = 32, kernel_size = 3
    B, H, W, C_in, C_out, K = 2, 16, 8, 4, 32, 3

    key = jax.random.PRNGKey(0)
    kx, k1, kb1, k2, kb2, k3, kb3 = jax.random.split(key, 7)

    x = jax.random.normal(kx, (B, H, W, C_in), dtype=jnp.float32)

    # Deterministic synthetic parameters. PyTorch Conv2d weight shape is
    # (C_out, C_in, 1, K); here stored directly as (K, C_in, C_out).
    scale = 1.0 / (C_in * K) ** 0.5
    w1 = jax.random.uniform(k1, (K, C_in, C_out), jnp.float32, -scale, scale)
    b1 = jax.random.uniform(kb1, (C_out,), jnp.float32, -scale, scale)
    w2 = jax.random.uniform(k2, (K, C_in, C_out), jnp.float32, -scale, scale)
    b2 = jax.random.uniform(kb2, (C_out,), jnp.float32, -scale, scale)
    w3 = jax.random.uniform(k3, (K, C_in, C_out), jnp.float32, -scale, scale)
    b3 = jax.random.uniform(kb3, (C_out,), jnp.float32, -scale, scale)
    params = (w1, b1, w2, b2, w3, b3)

    out = time_conv_pallas(x, params, kernel_size=K)
    out = jax.block_until_ready(out)

    ref = time_conv_reference(x, params, kernel_size=K)
    assert out.shape == (B, H, W - K + 1, C_out), out.shape
    assert jnp.allclose(out, ref, atol=1e-5, rtol=1e-5), \
        float(jnp.max(jnp.abs(out - ref)))

    print("KERNEL_OK")
</pallas_src>

<mosaic_0001>
module attributes {stable_mosaic.version = 11 : i64} {
  func.func @timeconv_kernel(%arg0: i32, %arg1: memref<96x12xf32, #tpu.memory_space<vmem>>, %arg2: memref<12x96xf32, #tpu.memory_space<vmem>>, %arg3: memref<1x96xf32, #tpu.memory_space<vmem>>, %arg4: memref<96x32xf32, #tpu.memory_space<vmem>>) attributes {dimension_semantics = [#tpu.dimension_semantics<parallel>], iteration_bounds = array<i64: 2>, scalar_prefetch = 0 : i64, scratch_operands = 0 : i64, tpu.core_type = #tpu.core_type<tc>, window_params = [{transform_indices = @transform_0, window_bounds = array<i64: 96, 12>}, {pipeline_mode = #tpu.pipeline_mode<synchronous>, transform_indices = @transform_1, window_bounds = array<i64: 12, 96>}, {pipeline_mode = #tpu.pipeline_mode<synchronous>, transform_indices = @transform_2, window_bounds = array<i64: 1, 96>}, {transform_indices = @transform_3, window_bounds = array<i64: 96, 32>}]} {
    %c0 = arith.constant 0 : index
    %c0_0 = arith.constant 0 : index
    %0 = vector.load %arg1[%c0, %c0_0] : memref<96x12xf32, #tpu.memory_space<vmem>>, vector<96x12xf32>
    %c0_1 = arith.constant 0 : index
    %c0_2 = arith.constant 0 : index
    %1 = vector.load %arg2[%c0_1, %c0_2] : memref<12x96xf32, #tpu.memory_space<vmem>>, vector<12x96xf32>
    %cst = arith.constant dense<0.000000e+00> : vector<96x96xf32>
    %2 = tpu.matmul %0, %1, %cst {dimension_numbers = #tpu.dot_dimension_numbers<[1], [0], [0], [1], [0, 0, 1, 1], [], []>} : vector<96x12xf32>, vector<12x96xf32>, vector<96x96xf32> -> vector<96x96xf32>
    %c0_3 = arith.constant 0 : index
    %c0_4 = arith.constant 0 : index
    %3 = vector.load %arg3[%c0_3, %c0_4] : memref<1x96xf32, #tpu.memory_space<vmem>>, vector<1x96xf32>
    %4 = vector.broadcast %3 : vector<1x96xf32> to vector<96x96xf32>
    %5 = arith.addf %2, %4 : vector<96x96xf32>
    %6 = vector.extract_strided_slice %5 {offsets = [0, 0], sizes = [96, 32], strides = [1, 1]} : vector<96x96xf32> to vector<96x32xf32>
    %7 = vector.extract_strided_slice %5 {offsets = [0, 32], sizes = [96, 32], strides = [1, 1]} : vector<96x96xf32> to vector<96x32xf32>
    %8 = arith.negf %7 : vector<96x32xf32>
    %9 = math.exp %8 : vector<96x32xf32>
    %cst_5 = arith.constant 1.000000e+00 : f32
    %10 = vector.broadcast %cst_5 : f32 to vector<96x32xf32>
    %11 = arith.addf %10, %9 : vector<96x32xf32>
    %12 = arith.divf %10, %11 : vector<96x32xf32>
    %13 = arith.addf %6, %12 : vector<96x32xf32>
    %14 = vector.extract_strided_slice %5 {offsets = [0, 64], sizes = [96, 32], strides = [1, 1]} : vector<96x96xf32> to vector<96x32xf32>
    %15 = arith.addf %13, %14 : vector<96x32xf32>
    %cst_6 = arith.constant 0.000000e+00 : f32
    %16 = vector.broadcast %cst_6 : f32 to vector<96x32xf32>
    %17 = arith.maximumf %15, %16 : vector<96x32xf32>
    %c0_7 = arith.constant 0 : index
    %c0_8 = arith.constant 0 : index
    %18 = vector.load %arg4[%c0_7, %c0_8] : memref<96x32xf32, #tpu.memory_space<vmem>>, vector<96x32xf32>
    tpu.vector_store %arg4[%c0_7, %c0_8], %17 {strides = array<i32>} : memref<96x32xf32, #tpu.memory_space<vmem>>, vector<96x32xf32>,
    return
  }
  func.func @transform_0(%arg0: i32) -> (i32, i32) {
    %c0_i32 = arith.constant 0 : i32
    %c0_i32_0 = arith.constant 0 : i32
    return %arg0, %c0_i32 : i32, i32
  }
  func.func @transform_1(%arg0: i32) -> (i32, i32) {
    %c0_i32 = arith.constant 0 : i32
    %c0_i32_0 = arith.constant 0 : i32
    %c0_i32_1 = arith.constant 0 : i32
    return %c0_i32, %c0_i32_0 : i32, i32
  }
  func.func @transform_2(%arg0: i32) -> (i32, i32) {
    %c0_i32 = arith.constant 0 : i32
    %c0_i32_0 = arith.constant 0 : i32
    %c0_i32_1 = arith.constant 0 : i32
    return %c0_i32, %c0_i32_0 : i32, i32
  }
  func.func @transform_3(%arg0: i32) -> (i32, i32) {
    %c0_i32 = arith.constant 0 : i32
    %c0_i32_0 = arith.constant 0 : i32
    return %arg0, %c0_i32 : i32, i32
  }
}

</mosaic_0001>

<llo_original>
// kernel: tpu_custom_call.1
$region0: #{tpu_custom_call.1}
  #allocation0 [shape = 'u32[]', space=smem, size = 0x4, offset = 0x4, fixed_abs, tag = 'smem constant byte address 0x4 - core index']
  #allocation1 [shape = 'u32[144,128]{1,0:T(1,128)}', space=vmem, size = 0x12000, scoped, tag = 'internal scratch']
  %s0 = inlined_call_operand.vmem [shape: f32[192,12], index: 0, kind: input, shape index: {}]
  %s1 = inlined_call_operand.vmem [shape: f32[12,96], index: 1, kind: input, shape index: {}]
  %s2 = inlined_call_operand.vmem [shape: f32[1,96], index: 2, kind: input, shape index: {}]
  %s3 = inlined_call_operand.vmem [shape: f32[192,32], index: 3, kind: output, shape index: {}]
  %s4 = sld [smem:[#allocation0]]
  $region45: #{tpu_custom_call.1} parent=0
    _
  %s6 = ssub.s32 1, %s4
  %s7 = scalar_select 0, %s6, %s4
  loop: start=0, step=1, limit=4
  $region2: #{tpu_custom_call.1} parent=0 // loop_pre_header
    _
  $region3: #{tpu_custom_call.1} parent=0 // loop_header
    %s9 = sphi 0, %s13
    %p10 = scmp.ge.s32.totalorder %s9, 4
    %s19 = sphi 0, %s21
    %s22 = sphi 0, %s19
    %s23 = sphi 0, %s22
    %s39 = sphi 0, %s23
    %s43 = sphi 0, %s43
    %s45 = sphi 0, %s43
    %s46 = sphi 0, %s45
    %s60 = sphi 0, %s46
    %s64 = sphi 0, %s64
    %s66 = sphi 0, %s64
    %s67 = sphi 0, %s66
    %s81 = sphi 0, %s67
    %s87 = sphi 0, %s89
    %s90 = sphi 0, %s87
    %s91 = sphi 0, %s90
    %s107 = sphi 0, %s91
  $region4: #{tpu_custom_call.1} parent=0 // loop_header_branch
    %12 = sbr.rel (%p10) target = $region8
  $region5: #{tpu_custom_call.1} parent=0 // loop_body
    %s14 = ssub.s32 %s9, 1
    %s15 = ssub.s32 %s9, 2
    %s16 = sadd.s32 %s9, 1
    %s17 = ssub.s32 %s9, %s16
    %p18 = scmp.eq.s32.totalorder %s17, 0
    %s20 = sadd.s32 %s19, 1
    %s21 = scalar_select %p18, %s19, %s20
    %p24 = pneg %p18
    %p25 = scmp.eq.s32.totalorder %s9, 1
    %p26 = por %p24, %p25
    %p27 = scmp.ne.s32.totalorder %s19, %s22
    %p28 = scmp.eq.s32.totalorder %s9, 0
    %p29 = por %p27, %p28
    %p30 = scmp.ne.s32.totalorder %s19, %s22
    %p31 = scmp.eq.s32.totalorder %s14, 1
    %p32 = por %p30, %p31
    %p33 = scmp.ne.s32.totalorder %s22, %s23
    %p34 = scmp.eq.s32.totalorder %s14, 0
    %p35 = por %p33, %p34
    %p36 = scmp.ne.s32.totalorder %s22, %s23
    %p37 = scmp.eq.s32.totalorder %s15, 1
    %p38 = por %p36, %p37
    %p40 = scmp.ne.s32.totalorder %s23, %s39
    %p41 = scmp.eq.s32.totalorder %s15, 0
    %p42 = por %p40, %p41
    %s44 = sadd.s32 %s43, 1
    %p47 = scmp.eq.s32.totalorder %s9, 1
    %p48 = scmp.ne.s32.totalorder %s43, %s45
    %p49 = scmp.eq.s32.totalorder %s9, 0
    %p50 = por %p48, %p49
    %p51 = scmp.ne.s32.totalorder %s43, %s45
    %p52 = scmp.eq.s32.totalorder %s14, 1
    %p53 = por %p51, %p52
    %p54 = scmp.ne.s32.totalorder %s45, %s46
    %p55 = scmp.eq.s32.totalorder %s14, 0
    %p56 = por %p54, %p55
    %p57 = scmp.ne.s32.totalorder %s45, %s46
    %p58 = scmp.eq.s32.totalorder %s15, 1
    %p59 = por %p57, %p58
    %p61 = scmp.ne.s32.totalorder %s46, %s60
    %p62 = scmp.eq.s32.totalorder %s15, 0
    %p63 = por %p61, %p62
    %s65 = sadd.s32 %s64, 1
    %p68 = scmp.eq.s32.totalorder %s9, 1
    %p69 = scmp.ne.s32.totalorder %s64, %s66
    %p70 = scmp.eq.s32.totalorder %s9, 0
    %p71 = por %p69, %p70
    %p72 = scmp.ne.s32.totalorder %s64, %s66
    %p73 = scmp.eq.s32.totalorder %s14, 1
    %p74 = por %p72, %p73
    %p75 = scmp.ne.s32.totalorder %s66, %s67
    %p76 = scmp.eq.s32.totalorder %s14, 0
    %p77 = por %p75, %p76
    %p78 = scmp.ne.s32.totalorder %s66, %s67
    %p79 = scmp.eq.s32.totalorder %s15, 1
    %p80 = por %p78, %p79
    %p82 = scmp.ne.s32.totalorder %s67, %s81
    %p83 = scmp.eq.s32.totalorder %s15, 0
    %p84 = por %p82, %p83
    %s85 = ssub.s32 %s9, %s16
    %p86 = scmp.eq.s32.totalorder %s85, 0
    %s88 = sadd.s32 %s87, 1
    %s89 = scalar_select %p86, %s87, %s88
    %p92 = pneg %p86
    %p93 = scmp.eq.s32.totalorder %s9, 1
    %p94 = por %p92, %p93
    %p95 = scmp.ne.s32.totalorder %s87, %s90
    %p96 = scmp.eq.s32.totalorder %s9, 0
    %p97 = por %p95, %p96
    %p98 = scmp.ne.s32.totalorder %s87, %s90
    %p99 = scmp.eq.s32.totalorder %s14, 1
    %p100 = por %p98, %p99
    %p101 = scmp.ne.s32.totalorder %s90, %s91
    %p102 = scmp.eq.s32.totalorder %s14, 0
    %p103 = por %p101, %p102
    %p104 = scmp.ne.s32.totalorder %s90, %s91
    %p105 = scmp.eq.s32.totalorder %s15, 1
    %p106 = por %p104, %p105
    %p108 = scmp.ne.s32.totalorder %s91, %s107
    %p109 = scmp.eq.s32.totalorder %s15, 0
    %p110 = por %p108, %p109
    %p111 = scmp.le.s32.totalorder 1, %s9
    %p112 = scmp.lt.s32.totalorder %s9, 3
    %p113 = pnand %p111, %p112
    %p114 = pneg %p113
    // Predicated region
    $region9: #{tpu_custom_call.1} parent=5 // pred_check
      _
    $region10: #{tpu_custom_call.1} parent=5 // pred_check_branch
      %116 = sbr.rel (%p113) target = $region12
    $region11: #{tpu_custom_call.1} parent=5 // pred_region
      %s117 = ssub.s32 %s9, 1
      // Predicated region
      $region13: #{tpu_custom_call.1} parent=11 // pred_check
        %p118 = pneg %p56
      $region14: #{tpu_custom_call.1} parent=11 // pred_check_branch
        %120 = sbr.rel (%p118) target = $region16
      $region15: #{tpu_custom_call.1} parent=11 // pred_region
        _
      $region16: #{tpu_custom_call.1} parent=11 // pred_fallthru
        _
      // Predicated region
      $region17: #{tpu_custom_call.1} parent=11 // pred_check
        %p121 = pneg %p77
      $region18: #{tpu_custom_call.1} parent=11 // pred_check_branch
        %123 = sbr.rel (%p121) target = $region20
      $region19: #{tpu_custom_call.1} parent=11 // pred_region
        _
      $region20: #{tpu_custom_call.1} parent=11 // pred_fallthru
        _
    $region12: #{tpu_custom_call.1} parent=5 // pred_fallthru
      _
    %p124 = scmp.lt.s32.totalorder %s9, 2
    // Predicated region
    $region21: #{tpu_custom_call.1} parent=5 // pred_check
      %p125 = pneg %p124
    $region22: #{tpu_custom_call.1} parent=5 // pred_check_branch
      %127 = sbr.rel (%p125) target = $region24
    $region23: #{tpu_custom_call.1} parent=5 // pred_region
      // Predicated region
      $region25: #{tpu_custom_call.1} parent=23 // pred_check
        %p128 = pneg %p29
      $region26: #{tpu_custom_call.1} parent=23 // pred_check_branch
        %130 = sbr.rel (%p128) target = $region28
      $region27: #{tpu_custom_call.1} parent=23 // pred_region
        %s131 = smul.u32 12, %s9
        %p132 = scmp.lt.s32.totalorder %s131, 23
        %s133 = scalar_select %p132, %s131, 23
        %s134 = smul.addr %s133, 8
        %s135 = scalar_lea.vmem %s0, %s134
        %s136 = smul.u32 12, %s9
      $region28: #{tpu_custom_call.1} parent=23 // pred_fallthru
        _
    $region24: #{tpu_custom_call.1} parent=5 // pred_fallthru
      _
    %p137 = scmp.le.s32.totalorder 1, %s9
    %p138 = scmp.lt.s32.totalorder %s9, 3
    %p139 = pnand %p137, %p138
    %p140 = pneg %p139
    // Predicated region
    $region29: #{tpu_custom_call.1} parent=5 // pred_check
      _
    $region30: #{tpu_custom_call.1} parent=5 // pred_check_branch
      %142 = sbr.rel (%p139) target = $region32
    $region31: #{tpu_custom_call.1} parent=5 // pred_region
      %s143 = ssub.s32 %s9, 1
      %s144 = smul.u32 12, %s14
      %p145 = scmp.lt.s32.totalorder %s144, 23
      %s146 = scalar_select %p145, %s144, 23
      %s147 = smul.addr %s146, 8
      %s148 = scalar_lea.vmem %s0, %s147
      %p149 = pneg %p35
      %p150 = pneg %p32
      %p151 = pneg %p56
      %p152 = pneg %p53
      %p153 = pneg %p77
      %p154 = pneg %p74
      %p155 = pneg %p103
      %p156 = pneg %p100
      %s157 = smul.u32 12, %s14
      %p158 = scmp.lt.s32.totalorder %s157, 23
      %s159 = scalar_select %p158, %s157, 23
      %s160 = smul.addr %s159, 8
      %s161 = scalar_lea.vmem %s3, %s160
      %s162 = smul.u32 12, %s14
      %p163 = scmp.lt.s32.totalorder %s162, 23
      %s164 = scalar_select %p163, %s162, 23
      %s165 = smul.addr %s164, 8
      %s166 = scalar_lea.vmem %s0, %s165
      %s167 = smul.u32 12, %s14
      %s168 = smul.u32 12, %s14
      %p169 = scmp.lt.s32.totalorder %s168, 23
      %s170 = scalar_select %p169, %s168, 23
      %s171 = smul.addr %s170, 8
      %s172 = scalar_lea.vmem %s3, %s171
      %s173 = smul.u32 12, %s14
      %v174 = vld [vmem:[%s166] sm:$0xff]
      %v175 = vld [vmem:[%s166 + $0x8] sm:$0xff]
      %v176 = vld [vmem:[%s166 + $0x10] sm:$0xff]
      %v177 = vld [vmem:[%s166 + $0x18] sm:$0xff]
      %v178 = vld [vmem:[%s166 + $0x20] sm:$0xff]
      %v179 = vld [vmem:[%s166 + $0x28] sm:$0xff]
      %v180 = vld [vmem:[%s166 + $0x30] sm:$0xff]
      %v181 = vld [vmem:[%s166 + $0x38] sm:$0xff]
      %v182 = vld [vmem:[%s166 + $0x40] sm:$0xff]
      %v183 = vld [vmem:[%s166 + $0x48] sm:$0xff]
      %v184 = vld [vmem:[%s166 + $0x50] sm:$0xff]
      %v185 = vld [vmem:[%s166 + $0x58] sm:$0xff]
      %v186 = vld [vmem:[%s1] sm:$0xff]
      %v187 = vld [vmem:[%s1 + $0x8] sm:$0xf]
      %v188 = vld [vmem:[%s2] sm:$0x1]
      %v190 = vlaneseq
      %v191 = vshrl.u32 %v190, 7
      %v192 = vsub.s32 0, %v191
      %v193 = vrot.slane %v188, %v192
      %vm195 = vcmask 97280
      %v197 = vsel %vm195, %v174, 0
      %v200 = vsel %vm195, %v175, 0
      %v203 = vsel %vm195, %v176, 0
      %v206 = vsel %vm195, %v177, 0
      %v209 = vsel %vm195, %v178, 0
      %v212 = vsel %vm195, %v179, 0
      %v215 = vsel %vm195, %v180, 0
      %v218 = vsel %vm195, %v181, 0
      %v221 = vsel %vm195, %v182, 0
      %v224 = vsel %vm195, %v183, 0
      %v227 = vsel %vm195, %v184, 0
      %v230 = vsel %vm195, %v185, 0
      %vm232 = vcmask 1043456
      %v234 = vsel %vm232, %v187, 0
      %236 = vmatprep.subr.mxu0 0.0
      %237 = vmatpush1.msra.mxu0 0.0
      %238 = vmatprep.subr.mxu0 0.0
      %239 = vmatpush1.msra.mxu0 0.0
      %240 = vmatprep.subr.mxu0 0.0
      %241 = vmatpush1.msra.mxu0 0.0
      %242 = vmatprep.subr.mxu0 0.0
      %243 = vmatpush1.msra.mxu0 0.0
      %244 = vmatprep.subr.mxu0 0.0
      %245 = vmatpush1.msra.mxu0 0.0
      %246 = vmatprep.subr.mxu0 0.0
      %247 = vmatpush1.msra.mxu0 0.0
      %248 = vmatprep.subr.mxu0 0.0
      %249 = vmatpush1.msra.mxu0 0.0
      %250 = vmatprep.subr.mxu0 0.0
      %251 = vmatpush1.msra.mxu0 0.0
      %252 = vmatprep.subr.mxu0 0.0
      %253 = vmatpush1.msra.mxu0 0.0
      %254 = vmatprep.subr.mxu0 0.0
      %255 = vmatpush1.msra.mxu0 0.0
      %256 = vmatprep.subr.mxu0 0.0
      %257 = vmatpush1.msra.mxu0 0.0
      %258 = vmatprep.subr.mxu0 0.0
      %259 = vmatpush1.msra.mxu0 0.0
      %260 = vmatprep.subr.mxu0 0.0
      %261 = vmatpush1.msra.mxu0 0.0
      %262 = vmatprep.subr.mxu0 0.0
      %263 = vmatpush1.msra.mxu0 0.0
      %264 = vmatprep.subr.mxu0 0.0
      %265 = vmatpush1.msra.mxu0 %v234
      %266 = vmatprep.subr.mxu0 0.0
      %267 = vmatpush1.msra.mxu0 %v186
      %268 = vmatprep.subr.mxu0 0.0
      %269 = vmatpush2.msra.mxu0 0.0
      %270 = vmatprep.subr.mxu0 0.0
      %271 = vmatpush2.msra.mxu0 0.0
      %272 = vmatprep.subr.mxu0 0.0
      %273 = vmatpush2.msra.mxu0 0.0
      %274 = vmatprep.subr.mxu0 0.0
      %275 = vmatpush2.msra.mxu0 0.0
      %276 = vmatprep.subr.mxu0 0.0
      %277 = vmatpush2.msra.mxu0 0.0
      %278 = vmatprep.subr.mxu0 0.0
      %279 = vmatpush2.msra.mxu0 0.0
      %280 = vmatprep.subr.mxu0 0.0
      %281 = vmatpush2.msra.mxu0 0.0
      %282 = vmatprep.subr.mxu0 0.0
      %283 = vmatpush2.msra.mxu0 0.0
      %284 = vmatprep.subr.mxu0 0.0
      %285 = vmatpush2.msra.mxu0 0.0
      %286 = vmatprep.subr.mxu0 0.0
      %287 = vmatpush2.msra.mxu0 0.0
      %288 = vmatprep.subr.mxu0 0.0
      %289 = vmatpush2.msra.mxu0 0.0
      %290 = vmatprep.subr.mxu0 0.0
      %291 = vmatpush2.msra.mxu0 0.0
      %292 = vmatprep.subr.mxu0 0.0
      %293 = vmatpush2.msra.mxu0 0.0
      %294 = vmatprep.subr.mxu0 0.0
      %295 = vmatpush2.msra.mxu0 0.0
      %296 = vmatprep.subr.mxu0 0.0
      %297 = vmatpush2.msra.mxu0 0.0
      %298 = vmatprep.subr.mxu0 0.0
      %299 = vmatpush2.msra.mxu0 0.0
      %300 = vmatprep.mubr.f32.mxu0 0.0
      %301 = vmatmul.mubr.f32.gmra.mxu0 %v197
      %v302 = vpop.f32.mrf.mxu0
      %v303 = vadd.f32 %v193, %v302
      %v304 = vpop.f32.mrf.mxu0
      %305 = vmatprep.mubr.f32.mxu0 0.0
      %306 = vmatmul.mubr.f32.gmra.mxu0 %v200
      %v307 = vpop.f32.mrf.mxu0
      %v308 = vadd.f32 %v193, %v307
      %v309 = vpop.f32.mrf.mxu0
      %310 = vmatprep.mubr.f32.mxu0 0.0
      %311 = vmatmul.mubr.f32.gmra.mxu0 %v203
      %v312 = vpop.f32.mrf.mxu0
      %v313 = vadd.f32 %v193, %v312
      %v314 = vpop.f32.mrf.mxu0
      %315 = vmatprep.mubr.f32.mxu0 0.0
      %316 = vmatmul.mubr.f32.gmra.mxu0 %v206
      %v317 = vpop.f32.mrf.mxu0
      %v318 = vadd.f32 %v193, %v317
      %v319 = vpop.f32.mrf.mxu0
      %320 = vmatprep.mubr.f32.mxu0 0.0
      %321 = vmatmul.mubr.f32.gmra.mxu0 %v209
      %v322 = vpop.f32.mrf.mxu0
      %v323 = vadd.f32 %v193, %v322
      %v324 = vpop.f32.mrf.mxu0
      %325 = vmatprep.mubr.f32.mxu0 0.0
      %326 = vmatmul.mubr.f32.gmra.mxu0 %v212
      %v327 = vpop.f32.mrf.mxu0
      %v328 = vadd.f32 %v193, %v327
      %v329 = vpop.f32.mrf.mxu0
      %330 = vmatprep.mubr.f32.mxu0 0.0
      %331 = vmatmul.mubr.f32.gmra.mxu0 %v215
      %v332 = vpop.f32.mrf.mxu0
      %v333 = vadd.f32 %v193, %v332
      %v334 = vpop.f32.mrf.mxu0
      %335 = vmatprep.mubr.f32.mxu0 0.0
      %336 = vmatmul.mubr.f32.gmra.mxu0 %v218
      %v337 = vpop.f32.mrf.mxu0
      %v338 = vadd.f32 %v193, %v337
      %v339 = vpop.f32.mrf.mxu0
      %340 = vmatprep.mubr.f32.mxu0 0.0
      %341 = vmatmul.mubr.f32.gmra.mxu0 %v221
      %v342 = vpop.f32.mrf.mxu0
      %v343 = vadd.f32 %v193, %v342
      %v344 = vpop.f32.mrf.mxu0
      %345 = vmatprep.mubr.f32.mxu0 0.0
      %346 = vmatmul.mubr.f32.gmra.mxu0 %v224
      %v347 = vpop.f32.mrf.mxu0
      %v348 = vadd.f32 %v193, %v347
      %v349 = vpop.f32.mrf.mxu0
      %350 = vmatprep.mubr.f32.mxu0 0.0
      %351 = vmatmul.mubr.f32.gmra.mxu0 %v227
      %v352 = vpop.f32.mrf.mxu0
      %v353 = vadd.f32 %v193, %v352
      %v354 = vpop.f32.mrf.mxu0
      %355 = vmatprep.mubr.f32.mxu0 0.0
      %356 = vmatmul.mubr.f32.gmra.mxu0 %v230
      %v357 = vpop.f32.mrf.mxu0
      %v358 = vadd.f32 %v193, %v357
      %v359 = vpop.f32.mrf.mxu0
      %360 = vdwg.mxu0
      %v361 = vxor.u32 %v303, 2147483648
      %v362 = vxor.u32 %v308, 2147483648
      %v363 = vxor.u32 %v313, 2147483648
      %v364 = vxor.u32 %v318, 2147483648
      %v365 = vxor.u32 %v323, 2147483648
      %v366 = vxor.u32 %v328, 2147483648
      %v367 = vxor.u32 %v333, 2147483648
      %v368 = vxor.u32 %v338, 2147483648
      %v369 = vxor.u32 %v343, 2147483648
      %v370 = vxor.u32 %v348, 2147483648
      %v371 = vxor.u32 %v353, 2147483648
      %v372 = vxor.u32 %v358, 2147483648
      %v373 = vmul.f32 %v361, 1.442695
      %v374 = vpow.pop %v373
      %v375 = vmul.f32 %v362, 1.442695
      %v376 = vpow.pop %v375
      %v377 = vmul.f32 %v363, 1.442695
      %v378 = vpow.pop %v377
      %v379 = vmul.f32 %v364, 1.442695
      %v380 = vpow.pop %v379
      %v381 = vmul.f32 %v365, 1.442695
      %v382 = vpow.pop %v381
      %v383 = vmul.f32 %v366, 1.442695
      %v384 = vpow.pop %v383
      %v385 = vmul.f32 %v367, 1.442695
      %v386 = vpow.pop %v385
      %v387 = vmul.f32 %v368, 1.442695
      %v388 = vpow.pop %v387
      %v389 = vmul.f32 %v369, 1.442695
      %v390 = vpow.pop %v389
      %v391 = vmul.f32 %v370, 1.442695
      %v392 = vpow.pop %v391
      %v393 = vmul.f32 %v371, 1.442695
      %v394 = vpow.pop %v393
      %v395 = vmul.f32 %v372, 1.442695
      %v396 = vpow.pop %v395
      %v397 = vadd.f32 %v374, 1.0
      %v398 = vadd.f32 %v376, 1.0
      %v399 = vadd.f32 %v378, 1.0
      %v400 = vadd.f32 %v380, 1.0
      %v401 = vadd.f32 %v382, 1.0
      %v402 = vadd.f32 %v384, 1.0
      %v403 = vadd.f32 %v386, 1.0
      %v404 = vadd.f32 %v388, 1.0
      %v405 = vadd.f32 %v390, 1.0
      %v406 = vadd.f32 %v392, 1.0
      %v407 = vadd.f32 %v394, 1.0
      %v408 = vadd.f32 %v396, 1.0
      %v409 = vrcp.pop %v397
      %v410 = vmul.f32 1.0, %v409
      %v411 = vrcp.pop %v398
      %v412 = vmul.f32 1.0, %v411
      %v413 = vrcp.pop %v399
      %v414 = vmul.f32 1.0, %v413
      %v415 = vrcp.pop %v400
      %v416 = vmul.f32 1.0, %v415
      %v417 = vrcp.pop %v401
      %v418 = vmul.f32 1.0, %v417
      %v419 = vrcp.pop %v402
      %v420 = vmul.f32 1.0, %v419
      %v421 = vrcp.pop %v403
      %v422 = vmul.f32 1.0, %v421
      %v423 = vrcp.pop %v404
      %v424 = vmul.f32 1.0, %v423
      %v425 = vrcp.pop %v405
      %v426 = vmul.f32 1.0, %v425
      %v427 = vrcp.pop %v406
      %v428 = vmul.f32 1.0, %v427
      %v429 = vrcp.pop %v407
      %v430 = vmul.f32 1.0, %v429
      %v431 = vrcp.pop %v408
      %v432 = vmul.f32 1.0, %v431
      %445 = vrot.lane.b32.xlu0 %v410, 96
      %v446 = vpop.permute.xlu0 %445
      %447 = vrot.lane.b32.xlu0 %v412, 96
      %v448 = vpop.permute.xlu0 %447
      %449 = vrot.lane.b32.xlu0 %v414, 96
      %v450 = vpop.permute.xlu0 %449
      %451 = vrot.lane.b32.xlu0 %v416, 96
      %v452 = vpop.permute.xlu0 %451
      %453 = vrot.lane.b32.xlu0 %v418, 96
      %v454 = vpop.permute.xlu0 %453
      %455 = vrot.lane.b32.xlu0 %v420, 96
      %v456 = vpop.permute.xlu0 %455
      %457 = vrot.lane.b32.xlu0 %v422, 96
      %v458 = vpop.permute.xlu0 %457
      %459 = vrot.lane.b32.xlu0 %v424, 96
      %v460 = vpop.permute.xlu0 %459
      %461 = vrot.lane.b32.xlu0 %v426, 96
      %v462 = vpop.permute.xlu0 %461
      %463 = vrot.lane.b32.xlu0 %v428, 96
      %v464 = vpop.permute.xlu0 %463
      %465 = vrot.lane.b32.xlu0 %v430, 96
      %v466 = vpop.permute.xlu0 %465
      %467 = vrot.lane.b32.xlu0 %v432, 96
      %v468 = vpop.permute.xlu0 %467
      %v481 = vadd.f32 %v303, %v446
      %v482 = vadd.f32 %v308, %v448
      %v483 = vadd.f32 %v313, %v450
      %v484 = vadd.f32 %v318, %v452
      %v485 = vadd.f32 %v323, %v454
      %v486 = vadd.f32 %v328, %v456
      %v487 = vadd.f32 %v333, %v458
      %v488 = vadd.f32 %v338, %v460
      %v489 = vadd.f32 %v343, %v462
      %v490 = vadd.f32 %v348, %v464
      %v491 = vadd.f32 %v353, %v466
      %v492 = vadd.f32 %v358, %v468
      %505 = vrot.lane.b32.xlu0 %v303, 64
      %v506 = vpop.permute.xlu0 %505
      %507 = vrot.lane.b32.xlu0 %v308, 64
      %v508 = vpop.permute.xlu0 %507
      %509 = vrot.lane.b32.xlu0 %v313, 64
      %v510 = vpop.permute.xlu0 %509
      %511 = vrot.lane.b32.xlu0 %v318, 64
      %v512 = vpop.permute.xlu0 %511
      %513 = vrot.lane.b32.xlu0 %v323, 64
      %v514 = vpop.permute.xlu0 %513
      %515 = vrot.lane.b32.xlu0 %v328, 64
      %v516 = vpop.permute.xlu0 %515
      %517 = vrot.lane.b32.xlu0 %v333, 64
      %v518 = vpop.permute.xlu0 %517
      %519 = vrot.lane.b32.xlu0 %v338, 64
      %v520 = vpop.permute.xlu0 %519
      %521 = vrot.lane.b32.xlu0 %v343, 64
      %v522 = vpop.permute.xlu0 %521
      %523 = vrot.lane.b32.xlu0 %v348, 64
      %v524 = vpop.permute.xlu0 %523
      %525 = vrot.lane.b32.xlu0 %v353, 64
      %v526 = vpop.permute.xlu0 %525
      %527 = vrot.lane.b32.xlu0 %v358, 64
      %v528 = vpop.permute.xlu0 %527
      %v541 = vadd.f32 %v481, %v506
      %v542 = vadd.f32 %v482, %v508
      %v543 = vadd.f32 %v483, %v510
      %v544 = vadd.f32 %v484, %v512
      %v545 = vadd.f32 %v485, %v514
      %v546 = vadd.f32 %v486, %v516
      %v547 = vadd.f32 %v487, %v518
      %v548 = vadd.f32 %v488, %v520
      %v549 = vadd.f32 %v489, %v522
      %v550 = vadd.f32 %v490, %v524
      %v551 = vadd.f32 %v491, %v526
      %v552 = vadd.f32 %v492, %v528
      %v553 = vmax.f32 %v541, 0.0
      %v554 = vmax.f32 %v542, 0.0
      %v555 = vmax.f32 %v543, 0.0
      %v556 = vmax.f32 %v544, 0.0
      %v557 = vmax.f32 %v545, 0.0
      %v558 = vmax.f32 %v546, 0.0
      %v559 = vmax.f32 %v547, 0.0
      %v560 = vmax.f32 %v548, 0.0
      %v561 = vmax.f32 %v549, 0.0
      %v562 = vmax.f32 %v550, 0.0
      %v563 = vmax.f32 %v551, 0.0
      %v564 = vmax.f32 %v552, 0.0
      %vm565 = vcmask 261120
      %566 = vst.msk [vmem:[%s172] sm:$0xff] %vm565, %v553
      %567 = vst.msk [vmem:[%s172 + $0x8] sm:$0xff] %vm565, %v554
      %568 = vst.msk [vmem:[%s172 + $0x10] sm:$0xff] %vm565, %v555
      %569 = vst.msk [vmem:[%s172 + $0x18] sm:$0xff] %vm565, %v556
      %570 = vst.msk [vmem:[%s172 + $0x20] sm:$0xff] %vm565, %v557
      %571 = vst.msk [vmem:[%s172 + $0x28] sm:$0xff] %vm565, %v558
      %572 = vst.msk [vmem:[%s172 + $0x30] sm:$0xff] %vm565, %v559
      %573 = vst.msk [vmem:[%s172 + $0x38] sm:$0xff] %vm565, %v560
      %574 = vst.msk [vmem:[%s172 + $0x40] sm:$0xff] %vm565, %v561
      %575 = vst.msk [vmem:[%s172 + $0x48] sm:$0xff] %vm565, %v562
      %576 = vst.msk [vmem:[%s172 + $0x50] sm:$0xff] %vm565, %v563
      %577 = vst.msk [vmem:[%s172 + $0x58] sm:$0xff] %vm565, %v564
      %s578 = smul.u32 12, %s14
      %p579 = scmp.lt.s32.totalorder %s578, 23
      %s580 = scalar_select %p579, %s578, 23
      %s581 = smul.addr %s580, 8
      %s582 = scalar_lea.vmem %s3, %s581
      // Predicated region
      $region33: #{tpu_custom_call.1} parent=31 // pred_check
        %p583 = pneg %p100
      $region34: #{tpu_custom_call.1} parent=31 // pred_check_branch
        %585 = sbr.rel (%p583) target = $region36
      $region35: #{tpu_custom_call.1} parent=31 // pred_region
        %s586 = smul.u32 12, %s14
      $region36: #{tpu_custom_call.1} parent=31 // pred_fallthru
        _
    $region32: #{tpu_custom_call.1} parent=5 // pred_fallthru
      _
    %p587 = scmp.le.s32.totalorder 2, %s9
    // Predicated region
    $region37: #{tpu_custom_call.1} parent=5 // pred_check
      %p588 = pneg %p587
    $region38: #{tpu_custom_call.1} parent=5 // pred_check_branch
      %590 = sbr.rel (%p588) target = $region40
    $region39: #{tpu_custom_call.1} parent=5 // pred_region
      %s591 = ssub.s32 %s9, 2
      // Predicated region
      $region41: #{tpu_custom_call.1} parent=39 // pred_check
        %p592 = pneg %p106
      $region42: #{tpu_custom_call.1} parent=39 // pred_check_branch
        %594 = sbr.rel (%p592) target = $region44
      $region43: #{tpu_custom_call.1} parent=39 // pred_region
        %s595 = smul.u32 12, %s15
        %p596 = scmp.lt.s32.totalorder %s595, 23
        %s597 = scalar_select %p596, %s595, 23
        %s598 = smul.addr %s597, 8
        %s599 = scalar_lea.vmem %s3, %s598
      $region44: #{tpu_custom_call.1} parent=39 // pred_fallthru
        _
    $region40: #{tpu_custom_call.1} parent=5 // pred_fallthru
      _
  $region6: #{tpu_custom_call.1} parent=0 // loop_footer
    %s13 = sadd.s32 1, %s9
  $region7: #{tpu_custom_call.1} parent=0 // loop_footer_branch
    %8 = sbr.rel target = $region3
  $region8: #{tpu_custom_call.1} parent=0 // loop_exit
    _

</llo_original>
